<compile_context>
chip_gen: v6e
topology: v6e:2x2x1
jax: 0.10.0
libtpu: 0.0.40
codegen_flags: <defaults>
</compile_context>

<pallas_src>
import functools
import random

import numpy as np
import jax
import jax.numpy as jnp
from jax.experimental import pallas as pl
from jax.experimental.pallas import tpu as pltpu


_VMEM_LIMIT = 32 * 1024 * 1024   # explicit; safe on v5e/v6e (128 MiB) and v7x (64 MiB)
_DOT_DTYPE = jnp.bfloat16        # MXU-native operand dtype; accumulation stays f32
_MAHA_TP = 256                   # patches per Mahalanobis grid step (v7x-safe with bf16)


def _round_up(x, m):
    return ((x + m - 1) // m) * m


# ----------------------------------------------------------------------------
# Pallas kernels
# ----------------------------------------------------------------------------
def _matmul_bias_relu_kernel(p_ref, w_ref, b_ref, o_ref):
    # p: (TM, Kp) bf16, w: (Kp, Np) bf16, b: (1, Np) f32, o: (TM, Np) o_dtype
    acc = jnp.dot(p_ref[...], w_ref[...], preferred_element_type=jnp.float32)
    o_ref[...] = jnp.maximum(acc + b_ref[...], 0.0).astype(o_ref.dtype)


def _maha_kernel(emb_ref, mean_ref, cinv_ref, out_ref):
    # emb: (B, TP, D) bf16   mean: (TP, 1, D) bf16   cinv: (TP, D, D) bf16
    # out: (B, TP) f32  (lane-dense)
    emb_t = jnp.swapaxes(emb_ref[...], 0, 1)                           # (TP, B, D) bf16
    delta = emb_t.astype(jnp.float32) - mean_ref[...].astype(jnp.float32)  # (TP, B, D)
    q = jnp.einsum('tbd,tde->tbe', delta.astype(_DOT_DTYPE), cinv_ref[...],
                   preferred_element_type=jnp.float32)                 # (TP, B, D) f32
    m = jnp.sum(q * delta, axis=-1)                                    # (TP, B) f32
    # Only the tiny (TP, B) scalar result is transposed (no 128^3 eye matmul).
    out_ref[...] = jnp.sqrt(jnp.maximum(m, 0.0)).T                     # (B, TP)


def _upsample_max_kernel(s_ref, wy_ref, wxt_ref, map_ref, max_ref, *, w_valid):
    # s: (1, ph, pw) f32   wy: (H, ph) f32   wxt: (pw, Wp) f32
    # map: (1, H, Wp) f32 (lane-dense, padded)   max: (1, 1, 1) f32
    t = jnp.dot(s_ref[0], wxt_ref[...], preferred_element_type=jnp.float32)   # (ph, Wp)
    sm = jnp.dot(wy_ref[...], t, preferred_element_type=jnp.float32)          # (H, Wp)
    map_ref[0] = sm
    cols = jax.lax.broadcasted_iota(jnp.int32, sm.shape, 1)
    masked = jnp.where(cols < w_valid, sm, -jnp.inf)                   # exclude pad cols
    mx = jnp.max(masked, axis=1, keepdims=True)
    mx = jnp.max(mx, axis=0, keepdims=True)                            # (1, 1)
    max_ref[...] = mx[None]                                            # (1, 1, 1)


# ----------------------------------------------------------------------------
# Wrappers
# ----------------------------------------------------------------------------
def _matmul_bias_relu(pmat, wmat, bvec, out_dtype):
    """(M, K) @ (K, N) + b, ReLU; M-tiled, K/N lane-padded, bf16 operands."""
    M, K = pmat.shape
    N = wmat.shape[1]
    Kp = _round_up(K, 128) if K >= 128 else _round_up(K, 8)
    Np = _round_up(N, 128)
    TM = min(1024, _round_up(M, 16))
    Mp = _round_up(M, TM)

    pmat_p = jnp.pad(pmat.astype(_DOT_DTYPE), ((0, Mp - M), (0, Kp - K)))
    wmat_p = jnp.pad(wmat.astype(_DOT_DTYPE), ((0, Kp - K), (0, Np - N)))
    b_p = jnp.pad(bvec.astype(jnp.float32).reshape(1, N), ((0, 0), (0, Np - N)))

    out = pl.pallas_call(
        _matmul_bias_relu_kernel,
        out_shape=jax.ShapeDtypeStruct((Mp, Np), out_dtype),
        grid=(Mp // TM,),
        in_specs=[
            pl.BlockSpec((TM, Kp), lambda i: (i, 0)),
            pl.BlockSpec((Kp, Np), lambda i: (0, 0)),
            pl.BlockSpec((1, Np), lambda i: (0, 0)),
        ],
        out_specs=pl.BlockSpec((TM, Np), lambda i: (i, 0)),
        compiler_params=pltpu.CompilerParams(
            dimension_semantics=("parallel",),
            vmem_limit_bytes=_VMEM_LIMIT),
    )(pmat_p, wmat_p, b_p)
    return out[:M, :N]


def conv2d_relu_nhwc(x_nhwc, w_oihw, b, stride, padding, out_dtype=_DOT_DTYPE):
    """NHWC conv + bias + ReLU via bf16 im2col (glue) + tiled Pallas matmul kernel."""
    x16 = x_nhwc.astype(_DOT_DTYPE)                      # bf16 BEFORE im2col (9x traffic)
    Bt, H, W, Cin = x16.shape
    Cout, _, kh, kw = w_oihw.shape
    patches = jax.lax.conv_general_dilated_patches(
        x16, (kh, kw), (stride, stride),
        ((padding, padding), (padding, padding)),
        dimension_numbers=("NHWC", "HWIO", "NHWC"))
    # patches: (B, Ho, Wo, Cin*kh*kw), feature dim is channel-major (C, kh, kw)
    _, Ho, Wo, K = patches.shape
    pmat = patches.reshape(Bt * Ho * Wo, K)
    wmat = w_oihw.reshape(Cout, Cin * kh * kw).T         # (K, Cout), channel-major too
    out = _matmul_bias_relu(pmat, wmat, b, out_dtype)
    return out.reshape(Bt, Ho, Wo, Cout)


def mahalanobis_pallas(emb_bpd, mean, cov_inv):
    """emb_bpd: (B, P, D), mean: (P, D), cov_inv: (P, D, D) -> (B, P) f32."""
    B, P, D = emb_bpd.shape
    TP = min(_MAHA_TP, _round_up(P, 128))
    Pp = _round_up(P, TP)
    pad = Pp - P

    emb_bpd = emb_bpd.astype(_DOT_DTYPE)
    mean = mean.astype(_DOT_DTYPE)
    cov_inv = cov_inv.astype(_DOT_DTYPE)
    if pad:
        emb_bpd = jnp.pad(emb_bpd, ((0, 0), (0, pad), (0, 0)))
        mean = jnp.pad(mean, ((0, pad), (0, 0)))
        cov_inv = jnp.pad(cov_inv, ((0, pad), (0, 0), (0, 0)))
    mean_r = mean.reshape(Pp, 1, D)

    out = pl.pallas_call(
        _maha_kernel,
        out_shape=jax.ShapeDtypeStruct((B, Pp), jnp.float32),
        grid=(Pp // TP,),
        in_specs=[
            pl.BlockSpec((B, TP, D), lambda p: (0, p, 0)),
            pl.BlockSpec((TP, 1, D), lambda p: (p, 0, 0)),
            pl.BlockSpec((TP, D, D), lambda p: (p, 0, 0)),
        ],
        out_specs=pl.BlockSpec((B, TP), lambda p: (0, p)),
        compiler_params=pltpu.CompilerParams(
            dimension_semantics=("parallel",),
            vmem_limit_bytes=_VMEM_LIMIT),
    )(emb_bpd, mean_r, cov_inv)
    return out[:, :P]                                    # (B, P)


def upsample_and_max_pallas(patch_scores, wy, wxt, out_w):
    """patch_scores: (B, ph, pw); wy: (H, ph); wxt: (pw, Wp, zero-padded cols)."""
    B, ph, pw = patch_scores.shape
    H = wy.shape[0]
    Wp = wxt.shape[1]
    kernel = functools.partial(_upsample_max_kernel, w_valid=out_w)
    score_map_p, img_max = pl.pallas_call(
        kernel,
        out_shape=(jax.ShapeDtypeStruct((B, H, Wp), jnp.float32),
                   jax.ShapeDtypeStruct((B, 1, 1), jnp.float32)),
        grid=(B,),
        in_specs=[
            pl.BlockSpec((1, ph, pw), lambda b: (b, 0, 0)),
            pl.BlockSpec((H, ph), lambda b: (0, 0)),
            pl.BlockSpec((pw, Wp), lambda b: (0, 0)),
        ],
        out_specs=(pl.BlockSpec((1, H, Wp), lambda b: (b, 0, 0)),
                   pl.BlockSpec((1, 1, 1), lambda b: (b, 0, 0))),
        compiler_params=pltpu.CompilerParams(
            dimension_semantics=("parallel",),
            vmem_limit_bytes=_VMEM_LIMIT),
    )(patch_scores.astype(jnp.float32), wy, wxt)
    return score_map_p[:, :, :out_w], img_max[:, 0, 0]


# ----------------------------------------------------------------------------
# Glue: deterministic parameter construction
# ----------------------------------------------------------------------------
def get_dims_indices_np(layers, feature_dim, net_feature_size):
    """Replicates anodet.get_dims_indices (python `random`, seed 1024)."""
    random.seed(1024)
    total = 0
    for layer in layers:
        total += net_feature_size[layer][0]
    feature_dim = min(feature_dim, total)
    return np.array(random.sample(range(0, total), feature_dim), dtype=np.int32)


def bilinear_matrix(out_size, in_size):
    """PyTorch F.interpolate(mode='bilinear', align_corners=False) as a matrix."""
    scale = in_size / out_size
    i = np.arange(out_size)
    src = (i + 0.5) * scale - 0.5
    src = np.clip(src, 0.0, None)
    i0 = np.minimum(np.floor(src).astype(np.int64), in_size - 1)
    i1 = np.minimum(i0 + 1, in_size - 1)
    lam = (src - i0).astype(np.float32)
    M = np.zeros((out_size, in_size), dtype=np.float32)
    M[i, i0] += (1.0 - lam)
    M[i, i1] += lam
    return M


def make_params(key, in_channels, H, W, feat_dim=50):
    net_feature_size = {0: [64], 1: [128], 2: [256], 3: [512]}  # resnet18
    layer_indices = [0, 1]
    ci = get_dims_indices_np(layer_indices, feat_dim, net_feature_size)
    D = ci.shape[0]
    Dp = _round_up(D, 64)                 # lane-friendly D (50 -> 64, NOT 128)
    ci_p = np.concatenate([ci, np.zeros((Dp - D,), np.int32)])   # pad indices; padded
    h1, w1 = H // 4, W // 4                                      # dims nulled by cov_inv=0
    P = h1 * w1

    ks = jax.random.split(key, 6)
    w1c = 0.1 * jax.random.normal(ks[0], (64, in_channels, 3, 3), jnp.float32)
    b1c = 0.01 * jax.random.normal(ks[1], (64,), jnp.float32)
    w2c = 0.05 * jax.random.normal(ks[2], (128, 64, 3, 3), jnp.float32)
    b2c = 0.01 * jax.random.normal(ks[3], (128,), jnp.float32)
    mean = 0.1 * jax.random.normal(ks[4], (P, D), jnp.float32)
    A = 0.1 * jax.random.normal(ks[5], (P, D, D), jnp.float32)
    cov_inv = jnp.eye(D, dtype=jnp.float32)[None] + jnp.einsum('pij,pkj->pik', A, A)

    # Zero-pad the D axis (padded rows/cols of cov_inv are zero => exact result).
    mean_p = jnp.pad(mean, ((0, 0), (0, Dp - D)))
    cov_inv_p = jnp.pad(cov_inv, ((0, 0), (0, Dp - D), (0, Dp - D)))

    # Lane-dense score map: zero-pad W columns of the interpolation matrix.
    Wp = _round_up(W, 128)
    wxt = np.zeros((w1, Wp), np.float32)
    wxt[:, :W] = bilinear_matrix(W, w1).T

    return {
        'w1': w1c, 'b1': b1c, 'w2': w2c, 'b2': b2c,
        'channel_indices': jnp.asarray(ci_p),
        'mean': mean_p.astype(jnp.bfloat16),        # pre-cast: no extra HBM pass at call
        'cov_inv': cov_inv_p.astype(jnp.bfloat16),
        'wy': jnp.asarray(bilinear_matrix(H, h1)),  # (H, h1)
        'wxt': jnp.asarray(wxt),                    # (w1, Wp)
    }


# ----------------------------------------------------------------------------
# Padim forward
# ----------------------------------------------------------------------------
def padim_forward(x, params):
    """x: (B, C, H, W) NCHW float32 -> (image_scores (B,), score_map (B, H, W))."""
    B = x.shape[0]
    W_in = x.shape[3]
    x_nhwc = jnp.transpose(x, (0, 2, 3, 1)).astype(_DOT_DTYPE)

    # --- embeddings extractor (synthetic backbone, layers [0, 1]) ---
    f1 = conv2d_relu_nhwc(x_nhwc, params['w1'], params['b1'],
                          stride=4, padding=1, out_dtype=_DOT_DTYPE)   # (B,h1,w1,64) bf16
    f2 = conv2d_relu_nhwc(f1, params['w2'], params['b2'],
                          stride=2, padding=1, out_dtype=_DOT_DTYPE)   # (B,h2,w2,128) bf16
    h1, w1 = f1.shape[1], f1.shape[2]
    ratio = h1 // f2.shape[1]

    # Channel selection without materializing the full 192-channel concat.
    ci = params['channel_indices']
    c1 = f1.shape[-1]
    from_f1 = ci < c1
    g1 = jnp.take(f1, jnp.where(from_f1, ci, 0), axis=-1)              # (B,h1,w1,Dp)
    g2 = jnp.take(f2, jnp.where(from_f1, 0, ci - c1), axis=-1)         # (B,h2,w2,Dp)
    g2u = jnp.repeat(jnp.repeat(g2, ratio, axis=1), ratio, axis=2)     # nearest upsample
    emb = jnp.where(from_f1[None, None, None, :], g1, g2u)             # (B,h1,w1,Dp) bf16

    P = h1 * w1
    emb_bpd = emb.reshape(B, P, emb.shape[-1])                         # (B,P,Dp), no transpose

    # --- Mahalanobis patch scores (Pallas, blocked over patches) ---
    patch_scores = mahalanobis_pallas(emb_bpd, params['mean'], params['cov_inv'])  # (B,P)
    patch_scores = patch_scores.reshape(B, h1, w1)

    # --- bilinear upsample to input size + image-level max (Pallas) ---
    score_map, image_scores = upsample_and_max_pallas(
        patch_scores, params['wy'], params['wxt'], W_in)               # (B,H,W), (B,)
    return image_scores, score_map


# ----------------------------------------------------------------------------
if __name__ == "__main__":
    B, C, H, W = 2, 3, 32, 32
    key = jax.random.PRNGKey(0)
    kx, kp = jax.random.split(key)
    x = jax.random.normal(kx, (B, C, H, W), jnp.float32)
    params = make_params(kp, C, H, W, feat_dim=50)

    # One-off check of the im2col feature ordering against lax.conv_general_dilated
    # (both paths use bf16 inputs with f32 accumulation).
    x_nhwc_chk = jnp.transpose(x, (0, 2, 3, 1)).astype(jnp.bfloat16)
    conv_ref = jax.lax.conv_general_dilated(
        x_nhwc_chk, jnp.transpose(params['w1'], (2, 3, 1, 0)).astype(jnp.bfloat16),
        (4, 4), ((1, 1), (1, 1)),
        dimension_numbers=("NHWC", "HWIO", "NHWC"),
        preferred_element_type=jnp.float32)
    conv_ref = jnp.maximum(conv_ref + params['b1'][None, None, None, :], 0.0)
    conv_pal = conv2d_relu_nhwc(x_nhwc_chk, params['w1'], params['b1'],
                                stride=4, padding=1, out_dtype=jnp.float32)
    assert float(jnp.max(jnp.abs(conv_pal - conv_ref))) < 0.1

    fwd = jax.jit(padim_forward)
    image_scores, score_map = fwd(x, params)
    jax.block_until_ready((image_scores, score_map))

    assert image_scores.shape == (B,)
    assert score_map.shape == (B, H, W)
    assert bool(jnp.all(jnp.isfinite(image_scores)))
    assert bool(jnp.all(jnp.isfinite(score_map)))
    print("KERNEL_OK")
</pallas_src>

<mosaic_0001>
module attributes {stable_mosaic.version = 11 : i64} {
  func.func @_matmul_bias_relu_kernel(%arg0: i32, %arg1: memref<128x32xbf16, #tpu.memory_space<vmem>>, %arg2: memref<32x128xbf16, #tpu.memory_space<vmem>>, %arg3: memref<1x128xf32, #tpu.memory_space<vmem>>, %arg4: memref<128x128xf32, #tpu.memory_space<vmem>>) attributes {dimension_semantics = [#tpu.dimension_semantics<parallel>], iteration_bounds = array<i64: 1>, scalar_prefetch = 0 : i64, scratch_operands = 0 : i64, tpu.core_type = #tpu.core_type<tc>, window_params = [{transform_indices = @transform_0, window_bounds = array<i64: 128, 32>}, {pipeline_mode = #tpu.pipeline_mode<synchronous>, transform_indices = @transform_1, window_bounds = array<i64: 32, 128>}, {pipeline_mode = #tpu.pipeline_mode<synchronous>, transform_indices = @transform_2, window_bounds = array<i64: 1, 128>}, {transform_indices = @transform_3, window_bounds = array<i64: 128, 128>}]} {
    %c0 = arith.constant 0 : index
    %c0_0 = arith.constant 0 : index
    %0 = vector.load %arg1[%c0, %c0_0] : memref<128x32xbf16, #tpu.memory_space<vmem>>, vector<128x32xbf16>
    %c0_1 = arith.constant 0 : index
    %c0_2 = arith.constant 0 : index
    %1 = vector.load %arg2[%c0_1, %c0_2] : memref<32x128xbf16, #tpu.memory_space<vmem>>, vector<32x128xbf16>
    %cst = arith.constant dense<0.000000e+00> : vector<128x128xf32>
    %2 = tpu.matmul %0, %1, %cst {dimension_numbers = #tpu.dot_dimension_numbers<[1], [0], [0], [1], [0, 0, 1, 1], [], []>} : vector<128x32xbf16>, vector<32x128xbf16>, vector<128x128xf32> -> vector<128x128xf32>
    %c0_3 = arith.constant 0 : index
    %c0_4 = arith.constant 0 : index
    %3 = vector.load %arg3[%c0_3, %c0_4] : memref<1x128xf32, #tpu.memory_space<vmem>>, vector<1x128xf32>
    %4 = vector.broadcast %3 : vector<1x128xf32> to vector<128x128xf32>
    %5 = arith.addf %2, %4 : vector<128x128xf32>
    %cst_5 = arith.constant 0.000000e+00 : f32
    %6 = vector.broadcast %cst_5 : f32 to vector<128x128xf32>
    %7 = arith.maximumf %5, %6 : vector<128x128xf32>
    %c0_6 = arith.constant 0 : index
    %c0_7 = arith.constant 0 : index
    %8 = vector.load %arg4[%c0_6, %c0_7] : memref<128x128xf32, #tpu.memory_space<vmem>>, vector<128x128xf32>
    tpu.vector_store %arg4[%c0_6, %c0_7], %7 {strides = array<i32>} : memref<128x128xf32, #tpu.memory_space<vmem>>, vector<128x128xf32>,
    return
  }
  func.func @transform_0(%arg0: i32) -> (i32, i32) {
    %c0_i32 = arith.constant 0 : i32
    %c0_i32_0 = arith.constant 0 : i32
    return %arg0, %c0_i32 : i32, i32
  }
  func.func @transform_1(%arg0: i32) -> (i32, i32) {
    %c0_i32 = arith.constant 0 : i32
    %c0_i32_0 = arith.constant 0 : i32
    %c0_i32_1 = arith.constant 0 : i32
    return %c0_i32, %c0_i32_0 : i32, i32
  }
  func.func @transform_2(%arg0: i32) -> (i32, i32) {
    %c0_i32 = arith.constant 0 : i32
    %c0_i32_0 = arith.constant 0 : i32
    %c0_i32_1 = arith.constant 0 : i32
    return %c0_i32, %c0_i32_0 : i32, i32
  }
  func.func @transform_3(%arg0: i32) -> (i32, i32) {
    %c0_i32 = arith.constant 0 : i32
    %c0_i32_0 = arith.constant 0 : i32
    return %arg0, %c0_i32 : i32, i32
  }
}

</mosaic_0001>

<llo_original>
// kernel: tpu_custom_call.1
$region0: #{tpu_custom_call.1}
  #allocation0 [shape = 'u32[]', space=smem, size = 0x4, offset = 0x4, fixed_abs, tag = 'smem constant byte address 0x4 - core index']
  #allocation1 [shape = 'u32[144,128]{1,0:T(1,128)}', space=vmem, size = 0x12000, scoped, tag = 'internal scratch']
  %s0 = inlined_call_operand.vmem [shape: bf16[128,32], index: 0, kind: input, shape index: {}]
  %s1 = inlined_call_operand.vmem [shape: bf16[32,128], index: 1, kind: input, shape index: {}]
  %s2 = inlined_call_operand.vmem [shape: f32[1,128], index: 2, kind: input, shape index: {}]
  %s3 = inlined_call_operand.hbm [shape: f32[128,128], index: 3, kind: output, shape index: {}]
  %s4 = sld [smem:[#allocation0]]
  $region22: #{tpu_custom_call.1} parent=0
    _
  %s6 = ssub.s32 1, %s4
  %s7 = scalar_select 0, %s6, %s4
  $region1: #{tpu_custom_call.1} parent=0
    #allocation2 [shape = 'u8[65536]{0}', space=vmem, size = 0x10000, scoped, tag = 'output window, operand 0, single buffered']
    #allocation3 [shape = 's32[1]{0}', space=sflag, size = 0x4, scoped, tag = 'scoped memory for tpu_custom_call.1']
    %8 = vsyncpa [#allocation3], 0
    // Predicated region
    $region2: #{tpu_custom_call.1} parent=1 // pred_check
      _
    $region3: #{tpu_custom_call.1} parent=1 // pred_check_branch
      %10 = sbr.rel (0) target = $region5
    $region4: #{tpu_custom_call.1} parent=1 // pred_region
      _
    $region5: #{tpu_custom_call.1} parent=1 // pred_fallthru
      _
    // Predicated region
    $region6: #{tpu_custom_call.1} parent=1 // pred_check
      _
    $region7: #{tpu_custom_call.1} parent=1 // pred_check_branch
      %12 = sbr.rel (0) target = $region9
    $region8: #{tpu_custom_call.1} parent=1 // pred_region
      _
    $region9: #{tpu_custom_call.1} parent=1 // pred_fallthru
      _
    // Predicated region
    $region10: #{tpu_custom_call.1} parent=1 // pred_check
      _
    $region11: #{tpu_custom_call.1} parent=1 // pred_check_branch
      %14 = sbr.rel (0) target = $region13
    $region12: #{tpu_custom_call.1} parent=1 // pred_region
      _
    $region13: #{tpu_custom_call.1} parent=1 // pred_fallthru
      _
    %v16 = vld [vmem:[%s0] sm:$0xf]
    %v17 = vld [vmem:[%s0 + $0x4] sm:$0xf]
    %v18 = vld [vmem:[%s0 + $0x8] sm:$0xf]
    %v19 = vld [vmem:[%s0 + $0xc] sm:$0xf]
    %v20 = vld [vmem:[%s0 + $0x10] sm:$0xf]
    %v21 = vld [vmem:[%s0 + $0x14] sm:$0xf]
    %v22 = vld [vmem:[%s0 + $0x18] sm:$0xf]
    %v23 = vld [vmem:[%s0 + $0x1c] sm:$0xf]
    %v24 = vld [vmem:[%s0 + $0x20] sm:$0xf]
    %v25 = vld [vmem:[%s0 + $0x24] sm:$0xf]
    %v26 = vld [vmem:[%s0 + $0x28] sm:$0xf]
    %v27 = vld [vmem:[%s0 + $0x2c] sm:$0xf]
    %v28 = vld [vmem:[%s0 + $0x30] sm:$0xf]
    %v29 = vld [vmem:[%s0 + $0x34] sm:$0xf]
    %v30 = vld [vmem:[%s0 + $0x38] sm:$0xf]
    %v31 = vld [vmem:[%s0 + $0x3c] sm:$0xf]
    %v32 = vld [vmem:[%s1] sm:$0xf]
    %v33 = vld [vmem:[%s1 + $0x4] sm:$0xf]
    %v34 = vld [vmem:[%s1 + $0x8] sm:$0xf]
    %v35 = vld [vmem:[%s1 + $0xc] sm:$0xf]
    %v36 = vld [vmem:[%s2] sm:$0x1]
    %v38 = vlaneseq
    %v39 = vshrl.u32 %v38, 7
    %v40 = vsub.s32 0, %v39
    %v41 = vrot.slane %v36, %v40
    %v59 = vunpack.c.l.b16 %v16
    %v60 = vunpack.c.l.b16 %v17
    %v61 = vunpack.c.l.b16 %v18
    %v62 = vunpack.c.l.b16 %v19
    %v63 = vunpack.c.l.b16 %v20
    %v64 = vunpack.c.l.b16 %v21
    %v65 = vunpack.c.l.b16 %v22
    %v66 = vunpack.c.l.b16 %v23
    %v67 = vunpack.c.l.b16 %v24
    %v68 = vunpack.c.l.b16 %v25
    %v69 = vunpack.c.l.b16 %v26
    %v70 = vunpack.c.l.b16 %v27
    %v71 = vunpack.c.l.b16 %v28
    %v72 = vunpack.c.l.b16 %v29
    %v73 = vunpack.c.l.b16 %v30
    %v74 = vunpack.c.l.b16 %v31
    %v75 = vpack.c.b16 %v60, %v59
    %v76 = vpack.c.b16 %v62, %v61
    %v77 = vpack.c.b16 %v64, %v63
    %v78 = vpack.c.b16 %v66, %v65
    %v79 = vpack.c.b16 %v68, %v67
    %v80 = vpack.c.b16 %v70, %v69
    %v81 = vpack.c.b16 %v72, %v71
    %v82 = vpack.c.b16 %v74, %v73
    %v87 = vunpack.c.l.b16 %v32
    %v88 = vunpack.c.l.b16 %v33
    %v89 = vunpack.c.l.b16 %v34
    %v90 = vunpack.c.l.b16 %v35
    %v91 = vpack.c.b16 %v88, %v87
    %v92 = vpack.c.b16 %v90, %v89
    %vm95 = vcmask 261120
    %v97 = vsel %vm95, %v75, 0
    %v100 = vsel %vm95, %v76, 0
    %v103 = vsel %vm95, %v77, 0
    %v106 = vsel %vm95, %v78, 0
    %v109 = vsel %vm95, %v79, 0
    %v112 = vsel %vm95, %v80, 0
    %v115 = vsel %vm95, %v81, 0
    %v118 = vsel %vm95, %v82, 0
    %120 = vmatprep.subr.bf16.mxu0 0
    %121 = vmatpush1.bf16.msra.mxu0 0
    %122 = vmatprep.subr.bf16.mxu0 0
    %123 = vmatpush1.bf16.msra.mxu0 0
    %124 = vmatprep.subr.bf16.mxu0 0
    %125 = vmatpush1.bf16.msra.mxu0 0
    %126 = vmatprep.subr.bf16.mxu0 0
    %127 = vmatpush1.bf16.msra.mxu0 0
    %128 = vmatprep.subr.bf16.mxu0 0
    %129 = vmatpush1.bf16.msra.mxu0 0
    %130 = vmatprep.subr.bf16.mxu0 0
    %131 = vmatpush1.bf16.msra.mxu0 0
    %132 = vmatprep.subr.bf16.mxu0 0
    %133 = vmatpush1.bf16.msra.mxu0 %v92
    %134 = vmatprep.subr.bf16.mxu0 0
    %135 = vmatpush1.bf16.msra.mxu0 %v91
    %136 = vmatprep.subr.bf16.mxu0 0
    %137 = vmatpush2.bf16.msra.mxu0 0
    %138 = vmatprep.subr.bf16.mxu0 0
    %139 = vmatpush2.bf16.msra.mxu0 0
    %140 = vmatprep.subr.bf16.mxu0 0
    %141 = vmatpush2.bf16.msra.mxu0 0
    %142 = vmatprep.subr.bf16.mxu0 0
    %143 = vmatpush2.bf16.msra.mxu0 0
    %144 = vmatprep.subr.bf16.mxu0 0
    %145 = vmatpush2.bf16.msra.mxu0 0
    %146 = vmatprep.subr.bf16.mxu0 0
    %147 = vmatpush2.bf16.msra.mxu0 0
    %148 = vmatprep.subr.bf16.mxu0 0
    %149 = vmatpush2.bf16.msra.mxu0 0
    %150 = vmatprep.subr.bf16.mxu0 0
    %151 = vmatpush2.bf16.msra.mxu0 0
    %152 = vmatprep.mubr.bf16.mxu0 0
    %153 = vmatmul.mubr.bf16.gmra.mxu0 %v97
    %v154 = vpop.f32.mrf.mxu0
    %v155 = vadd.f32 %v41, %v154
    %v156 = vpop.f32.mrf.mxu0
    %v157 = vpop.f32.mrf.mxu0
    %v158 = vadd.f32 %v41, %v157
    %v159 = vpop.f32.mrf.mxu0
    %160 = vmatprep.mubr.bf16.mxu0 0
    %161 = vmatmul.mubr.bf16.gmra.mxu0 %v100
    %v162 = vpop.f32.mrf.mxu0
    %v163 = vadd.f32 %v41, %v162
    %v164 = vpop.f32.mrf.mxu0
    %v165 = vpop.f32.mrf.mxu0
    %v166 = vadd.f32 %v41, %v165
    %v167 = vpop.f32.mrf.mxu0
    %168 = vmatprep.mubr.bf16.mxu0 0
    %169 = vmatmul.mubr.bf16.gmra.mxu0 %v103
    %v170 = vpop.f32.mrf.mxu0
    %v171 = vadd.f32 %v41, %v170
    %v172 = vpop.f32.mrf.mxu0
    %v173 = vpop.f32.mrf.mxu0
    %v174 = vadd.f32 %v41, %v173
    %v175 = vpop.f32.mrf.mxu0
    %176 = vmatprep.mubr.bf16.mxu0 0
    %177 = vmatmul.mubr.bf16.gmra.mxu0 %v106
    %v178 = vpop.f32.mrf.mxu0
    %v179 = vadd.f32 %v41, %v178
    %v180 = vpop.f32.mrf.mxu0
    %v181 = vpop.f32.mrf.mxu0
    %v182 = vadd.f32 %v41, %v181
    %v183 = vpop.f32.mrf.mxu0
    %184 = vmatprep.mubr.bf16.mxu0 0
    %185 = vmatmul.mubr.bf16.gmra.mxu0 %v109
    %v186 = vpop.f32.mrf.mxu0
    %v187 = vadd.f32 %v41, %v186
    %v188 = vpop.f32.mrf.mxu0
    %v189 = vpop.f32.mrf.mxu0
    %v190 = vadd.f32 %v41, %v189
    %v191 = vpop.f32.mrf.mxu0
    %192 = vmatprep.mubr.bf16.mxu0 0
    %193 = vmatmul.mubr.bf16.gmra.mxu0 %v112
    %v194 = vpop.f32.mrf.mxu0
    %v195 = vadd.f32 %v41, %v194
    %v196 = vpop.f32.mrf.mxu0
    %v197 = vpop.f32.mrf.mxu0
    %v198 = vadd.f32 %v41, %v197
    %v199 = vpop.f32.mrf.mxu0
    %200 = vmatprep.mubr.bf16.mxu0 0
    %201 = vmatmul.mubr.bf16.gmra.mxu0 %v115
    %v202 = vpop.f32.mrf.mxu0
    %v203 = vadd.f32 %v41, %v202
    %v204 = vpop.f32.mrf.mxu0
    %v205 = vpop.f32.mrf.mxu0
    %v206 = vadd.f32 %v41, %v205
    %v207 = vpop.f32.mrf.mxu0
    %208 = vmatprep.mubr.bf16.mxu0 0
    %209 = vmatmul.mubr.bf16.gmra.mxu0 %v118
    %v210 = vpop.f32.mrf.mxu0
    %v211 = vadd.f32 %v41, %v210
    %v212 = vpop.f32.mrf.mxu0
    %v213 = vpop.f32.mrf.mxu0
    %v214 = vadd.f32 %v41, %v213
    %v215 = vpop.f32.mrf.mxu0
    %216 = vdwg.mxu0
    %v217 = vmax.f32 %v155, 0.0
    %v218 = vmax.f32 %v158, 0.0
    %v219 = vmax.f32 %v163, 0.0
    %v220 = vmax.f32 %v166, 0.0
    %v221 = vmax.f32 %v171, 0.0
    %v222 = vmax.f32 %v174, 0.0
    %v223 = vmax.f32 %v179, 0.0
    %v224 = vmax.f32 %v182, 0.0
    %v225 = vmax.f32 %v187, 0.0
    %v226 = vmax.f32 %v190, 0.0
    %v227 = vmax.f32 %v195, 0.0
    %v228 = vmax.f32 %v198, 0.0
    %v229 = vmax.f32 %v203, 0.0
    %v230 = vmax.f32 %v206, 0.0
    %v231 = vmax.f32 %v211, 0.0
    %v232 = vmax.f32 %v214, 0.0
    %233 = vst [vmem:[#allocation2] sm:$0xff] %v217
    %234 = vst [vmem:[#allocation2 + $0x8] sm:$0xff] %v218
    %235 = vst [vmem:[#allocation2 + $0x10] sm:$0xff] %v219
    %236 = vst [vmem:[#allocation2 + $0x18] sm:$0xff] %v220
    %237 = vst [vmem:[#allocation2 + $0x20] sm:$0xff] %v221
    %238 = vst [vmem:[#allocation2 + $0x28] sm:$0xff] %v222
    %239 = vst [vmem:[#allocation2 + $0x30] sm:$0xff] %v223
    %240 = vst [vmem:[#allocation2 + $0x38] sm:$0xff] %v224
    %241 = vst [vmem:[#allocation2 + $0x40] sm:$0xff] %v225
    %242 = vst [vmem:[#allocation2 + $0x48] sm:$0xff] %v226
    %243 = vst [vmem:[#allocation2 + $0x50] sm:$0xff] %v227
    %244 = vst [vmem:[#allocation2 + $0x58] sm:$0xff] %v228
    %245 = vst [vmem:[#allocation2 + $0x60] sm:$0xff] %v229
    %246 = vst [vmem:[#allocation2 + $0x68] sm:$0xff] %v230
    %247 = vst [vmem:[#allocation2 + $0x70] sm:$0xff] %v231
    %248 = vst [vmem:[#allocation2 + $0x78] sm:$0xff] %v232
    // Predicated region
    $region14: #{tpu_custom_call.1} parent=1 // pred_check
      _
    $region15: #{tpu_custom_call.1} parent=1 // pred_check_branch
      %250 = sbr.rel (0) target = $region17
    $region16: #{tpu_custom_call.1} parent=1 // pred_region
      %s252 = ssub.s32 2048, 2048
      %253 = vsyncadd [#allocation3], %s252
      %s254 = sshll.u32 [#allocation2], 4
      %s255 = int_to_ptr.vmem [resolvable:$true] %s254
      %260 = dma.vmem_to_hbm [thread:$0]  %s255, 2048, %s3, [#allocation3], 128, 128, 8
    $region17: #{tpu_custom_call.1} parent=1 // pred_fallthru
      _
    // Predicated region
    $region18: #{tpu_custom_call.1} parent=1 // pred_check
      _
    $region19: #{tpu_custom_call.1} parent=1 // pred_check_branch
      %262 = sbr.rel (0) target = $region21
    $region20: #{tpu_custom_call.1} parent=1 // pred_region
      %263 = dma.done [#allocation3], 2048
    $region21: #{tpu_custom_call.1} parent=1 // pred_fallthru
      _
    %264 = vsyncpa [#allocation3], 1

</llo_original>
